<compile_context>
chip_gen: v6e
topology: v6e:2x2x1
jax: 0.10.0
libtpu: 0.0.40
codegen_flags: <defaults>
</compile_context>

<pallas_src>
import jax
import jax.numpy as jnp
from jax.experimental import pallas as pl
from jax.experimental.pallas import tpu as pltpu


# ----------------------------------------------------------------------------
# One-time setup (PyTorch __init__): normalized laplacian + padded bf16 copy.
# ----------------------------------------------------------------------------
def diffuse_laplace(adj: jnp.ndarray) -> jnp.ndarray:
    """laplace = diag((rowsum+1)^-0.5) @ adj @ diag((colsum+1)^-0.5)."""
    d_x = jnp.power(jnp.sum(adj, axis=1) + 1.0, -0.5)   # (N,)
    d_y = jnp.power(jnp.sum(adj, axis=0) + 1.0, -0.5)   # (N,)
    return d_x[:, None] * adj * d_y[None, :]


def _round_up(a: int, b: int) -> int:
    return ((a + b - 1) // b) * b


def padded_n(n: int) -> int:
    # Lane-dense K dimension for the dominant lap operand.
    return _round_up(max(n, 128), 128)


def prepare_laplace(laplace: jnp.ndarray, n_pad: int) -> jnp.ndarray:
    """Zero-pad to (n_pad, n_pad) and cast to bf16. Done once, like __init__."""
    n = laplace.shape[0]
    lap_p = jnp.zeros((n_pad, n_pad), jnp.float32).at[:n, :n].set(
        laplace.astype(jnp.float32))
    return lap_p.astype(jnp.bfloat16)


# ----------------------------------------------------------------------------
# Tile / VMEM planning.
# ----------------------------------------------------------------------------
def _vmem_limit_bytes() -> int:
    try:
        cap = int(pltpu.get_tpu_info().vmem_capacity_bytes)
    except Exception:
        cap = 64 * 1024 * 1024          # conservative (v7x-sized) fallback
    # ~96 MiB on v5e/v6e (128 MiB physical), ~48 MiB on v7x (64 MiB physical).
    return (cap * 3) // 4


def _plan(n_pad: int, embed_dim: int, requested_tm: int = 512):
    embed_pad = _round_up(max(embed_dim, 128), 128)
    vmem_limit = _vmem_limit_bytes()

    # VMEM accounting per row of a tile:
    #   2x double-buffered bf16 lap row (2 * n_pad * 2 B)
    # + 2x double-buffered f32 output row (2 * embed_pad * 4 B)
    # plus one resident bf16 xw block (n_pad * embed_pad * 2 B).
    resident = n_pad * embed_pad * 2
    per_row = 2 * n_pad * 2 + 2 * embed_pad * 4
    budget = int(vmem_limit * 0.6) - resident
    max_tm_budget = max(16, ((budget // per_row) // 16) * 16) if budget > 0 else 16

    # Keep >=2 grid steps so the "parallel" row axis can shard across v7x's 2 TCs.
    target = min(requested_tm, max_tm_budget, max(16, n_pad // 2))
    tm = 16
    for cand in (1024, 512, 256, 128, 64, 32, 16):
        if cand <= target and n_pad % cand == 0:
            tm = cand
            break
    return embed_pad, tm, vmem_limit


# ----------------------------------------------------------------------------
# Kernel: collected row-tile = relu(lap_tile @ xw)   (reassociated matmul)
# ----------------------------------------------------------------------------
def _gcn_collect_kernel(lap_ref, xw_ref, col_ref):
    # lap_ref : (TM, N_pad)       bf16 row tile of the laplacian (double-buffered)
    # xw_ref  : (N_pad, E_pad)    bf16 precomputed x @ W^T (resident)
    # col_ref : (TM, E_pad)       f32 output tile
    col = jnp.dot(lap_ref[...], xw_ref[...], preferred_element_type=jnp.float32)
    col_ref[...] = jnp.maximum(col, 0.0)


def topo_space_gcn_forward(lap_p: jnp.ndarray, x: jnp.ndarray, w_t: jnp.ndarray):
    """Forward pass.

    lap_p : (n_pad, n_pad) bf16 padded normalized laplacian (from prepare_laplace).
    x     : (n, in_dim) node features.
    w_t   : (in_dim, embed_dim) linear weight, transposed (lm(x) = x @ w_t).

    Returns (collected, linear), each (n, embed_dim) float32.
    """
    n, _ = x.shape
    embed_dim = w_t.shape[1]
    n_pad = lap_p.shape[0]
    embed_pad, tm, vmem_limit = _plan(n_pad, embed_dim)

    xf = x.astype(jnp.float32)
    wf = w_t.astype(jnp.float32)

    # linear branch in plain XLA; it is exactly the xw the kernel needs.
    xw = jnp.dot(xf, wf)                                  # (n, embed_dim) f32
    linear = xw

    # relu((lap @ x) @ W) == relu(lap @ (x @ W)) up to fp rounding.
    xw_p = jnp.zeros((n_pad, embed_pad), jnp.bfloat16).at[:n, :embed_dim].set(
        xw.astype(jnp.bfloat16))

    grid = (n_pad // tm,)
    cost = pl.CostEstimate(
        flops=2 * n_pad * n_pad * embed_pad,
        transcendentals=0,
        bytes_accessed=(n_pad * n_pad * 2          # laplacian (bf16)
                        + n_pad * embed_pad * 2    # xw (bf16)
                        + n_pad * embed_pad * 4),  # collected (f32)
    )

    collected_p = pl.pallas_call(
        _gcn_collect_kernel,
        out_shape=jax.ShapeDtypeStruct((n_pad, embed_pad), jnp.float32),
        grid=grid,
        in_specs=[
            pl.BlockSpec((tm, n_pad), lambda i: (i, 0)),         # lap row tile
            pl.BlockSpec((n_pad, embed_pad), lambda i: (0, 0)),  # xw (resident)
        ],
        out_specs=pl.BlockSpec((tm, embed_pad), lambda i: (i, 0)),
        compiler_params=pltpu.CompilerParams(
            dimension_semantics=("parallel",),   # megacore row sharding (v7x)
            vmem_limit_bytes=int(vmem_limit),
        ),
        cost_estimate=cost,
    )(lap_p, xw_p)

    collected = collected_p[:n, :embed_dim]
    return collected, linear


if __name__ == "__main__":
    key = jax.random.PRNGKey(0)
    k_adj, k_x, k_w = jax.random.split(key, 3)

    n_nodes, in_dim, embed_dim = 16, 8, 32

    # Deterministic synthetic adjacency (non-negative, like a weighted graph).
    adj = jax.random.uniform(k_adj, (n_nodes, n_nodes), dtype=jnp.float32)
    # Deterministic node features.
    x = jax.random.normal(k_x, (n_nodes, in_dim), dtype=jnp.float32)
    # nn.Linear(in_dim, embed_dim, bias=False): weight shape (embed_dim, in_dim);
    # store transposed so lm(x) = x @ w_t.
    bound = 1.0 / (in_dim ** 0.5)
    w = jax.random.uniform(k_w, (embed_dim, in_dim), dtype=jnp.float32,
                           minval=-bound, maxval=bound)
    w_t = w.T

    # ---- one-time setup (PyTorch __init__): laplacian + padded bf16 copy ----
    laplace = diffuse_laplace(adj)
    n_pad = padded_n(n_nodes)
    lap_p = prepare_laplace(laplace, n_pad)
    jax.block_until_ready(lap_p)

    # ---- forward pass (hot path) ----
    collected, linear = topo_space_gcn_forward(lap_p, x, w_t)
    jax.block_until_ready((collected, linear))

    # Reference check (plain JAX, original association).
    ref_lin = x @ w_t
    ref_col = jnp.maximum((laplace @ x) @ w_t, 0.0)
    assert collected.shape == (n_nodes, embed_dim)
    assert linear.shape == (n_nodes, embed_dim)
    # bf16 laplacian / xw feed with f32 accumulation -> relaxed tolerance.
    assert jnp.allclose(collected, ref_col, atol=2e-2, rtol=2e-2)
    # linear branch stays on the exact f32 path.
    assert jnp.allclose(linear, ref_lin, atol=1e-4, rtol=1e-4)

    print("KERNEL_OK")
</pallas_src>

<mosaic_0001>
module attributes {stable_mosaic.version = 11 : i64} {
  func.func @_gcn_collect_kernel(%arg0: i32, %arg1: memref<64x128xbf16, #tpu.memory_space<vmem>>, %arg2: memref<128x128xbf16, #tpu.memory_space<vmem>>, %arg3: memref<64x128xf32, #tpu.memory_space<vmem>>) attributes {dimension_semantics = [#tpu.dimension_semantics<parallel>], iteration_bounds = array<i64: 2>, scalar_prefetch = 0 : i64, scratch_operands = 0 : i64, tpu.core_type = #tpu.core_type<tc>, window_params = [{transform_indices = @transform_0, window_bounds = array<i64: 64, 128>}, {pipeline_mode = #tpu.pipeline_mode<synchronous>, transform_indices = @transform_1, window_bounds = array<i64: 128, 128>}, {transform_indices = @transform_2, window_bounds = array<i64: 64, 128>}]} {
    %c0 = arith.constant 0 : index
    %c0_0 = arith.constant 0 : index
    %0 = vector.load %arg1[%c0, %c0_0] : memref<64x128xbf16, #tpu.memory_space<vmem>>, vector<64x128xbf16>
    %c0_1 = arith.constant 0 : index
    %c0_2 = arith.constant 0 : index
    %1 = vector.load %arg2[%c0_1, %c0_2] : memref<128x128xbf16, #tpu.memory_space<vmem>>, vector<128x128xbf16>
    %cst = arith.constant dense<0.000000e+00> : vector<64x128xf32>
    %2 = tpu.matmul %0, %1, %cst {dimension_numbers = #tpu.dot_dimension_numbers<[1], [0], [0], [1], [0, 0, 1, 1], [], []>} : vector<64x128xbf16>, vector<128x128xbf16>, vector<64x128xf32> -> vector<64x128xf32>
    %cst_3 = arith.constant 0.000000e+00 : f32
    %3 = vector.broadcast %cst_3 : f32 to vector<64x128xf32>
    %4 = arith.maximumf %2, %3 : vector<64x128xf32>
    %c0_4 = arith.constant 0 : index
    %c0_5 = arith.constant 0 : index
    %5 = vector.load %arg3[%c0_4, %c0_5] : memref<64x128xf32, #tpu.memory_space<vmem>>, vector<64x128xf32>
    tpu.vector_store %arg3[%c0_4, %c0_5], %4 {strides = array<i32>} : memref<64x128xf32, #tpu.memory_space<vmem>>, vector<64x128xf32>,
    return
  }
  func.func @transform_0(%arg0: i32) -> (i32, i32) {
    %c0_i32 = arith.constant 0 : i32
    %c0_i32_0 = arith.constant 0 : i32
    return %arg0, %c0_i32 : i32, i32
  }
  func.func @transform_1(%arg0: i32) -> (i32, i32) {
    %c0_i32 = arith.constant 0 : i32
    %c0_i32_0 = arith.constant 0 : i32
    %c0_i32_1 = arith.constant 0 : i32
    return %c0_i32, %c0_i32_0 : i32, i32
  }
  func.func @transform_2(%arg0: i32) -> (i32, i32) {
    %c0_i32 = arith.constant 0 : i32
    %c0_i32_0 = arith.constant 0 : i32
    return %arg0, %c0_i32 : i32, i32
  }
}

</mosaic_0001>

<llo_original>
// kernel: tpu_custom_call.1
$region0: #{tpu_custom_call.1}
  #allocation0 [shape = 'u32[]', space=smem, size = 0x4, offset = 0x4, fixed_abs, tag = 'smem constant byte address 0x4 - core index']
  #allocation1 [shape = 'u32[144,128]{1,0:T(1,128)}', space=vmem, size = 0x12000, scoped, tag = 'internal scratch']
  %s0 = inlined_call_operand.hbm [shape: bf16[128,128], index: 0, kind: input, shape index: {}]
  %s1 = inlined_call_operand.hbm [shape: bf16[128,128], index: 1, kind: input, shape index: {}]
  %s2 = inlined_call_operand.hbm [shape: f32[128,128], index: 2, kind: output, shape index: {}]
  %s3 = sld [smem:[#allocation0]]
  $region49: #{tpu_custom_call.1} parent=0
    _
  %s5 = ssub.s32 1, %s3
  %s6 = scalar_select 0, %s5, %s3
  $region1: #{tpu_custom_call.1} parent=0
    #allocation2 [shape = 'u8[32768]{0}', space=vmem, size = 0x8000, scoped, tag = 'input window, operand 0']
    #allocation3 [shape = 's32[2]{0}', space=sflag, size = 0x8, scoped, tag = 'scoped memory for tpu_custom_call.1']
    #allocation4 [shape = 's32[2]{0}', space=sflag, size = 0x8, scoped, tag = 'scoped memory for tpu_custom_call.1']
    #allocation5 [shape = 'u8[32768]{0}', space=vmem, size = 0x8000, scoped, tag = 'input window, operand 1, single buffered']
    #allocation6 [shape = 's32[1]{0}', space=sflag, size = 0x4, scoped, tag = 'scoped memory for tpu_custom_call.1']
    #allocation7 [shape = 'u8[65536]{0}', space=vmem, size = 0x10000, scoped, tag = 'output window, operand 0']
    %7 = vsyncpa [#allocation3], 0
    %s8 = scalar_lea.sflag [#allocation3], 1
    %9 = vsyncpa %s8, 0
    %10 = vsyncpa [#allocation6], 0
    %11 = vsyncpa [#allocation4], 0
    %s12 = scalar_lea.sflag [#allocation4], 1
    %13 = vsyncpa %s12, 0
    loop: start=0, step=1, limit=4
    $region2: #{tpu_custom_call.1} parent=1 // loop_pre_header
      _
    $region3: #{tpu_custom_call.1} parent=1 // loop_header
      %s15 = sphi 0, %s19
      %p16 = scmp.ge.s32.totalorder %s15, 4
      %s25 = sphi 0, %s27
      %s28 = sphi 0, %s25
      %s29 = sphi 0, %s28
      %s45 = sphi 0, %s29
      %s49 = sphi 0, %s49
      %s51 = sphi 0, %s49
      %s52 = sphi 0, %s51
      %s66 = sphi 0, %s52
      %s72 = sphi 0, %s74
      %s75 = sphi 0, %s72
      %s76 = sphi 0, %s75
      %s92 = sphi 0, %s76
    $region4: #{tpu_custom_call.1} parent=1 // loop_header_branch
      %18 = sbr.rel (%p16) target = $region8
    $region5: #{tpu_custom_call.1} parent=1 // loop_body
      %s20 = ssub.s32 %s15, 1
      %s21 = ssub.s32 %s15, 2
      %s22 = sadd.s32 %s15, 1
      %s23 = ssub.s32 %s15, %s22
      %p24 = scmp.eq.s32.totalorder %s23, 0
      %s26 = sadd.s32 %s25, 1
      %s27 = scalar_select %p24, %s25, %s26
      %p30 = pneg %p24
      %p31 = scmp.eq.s32.totalorder %s15, 1
      %p32 = por %p30, %p31
      %p33 = scmp.ne.s32.totalorder %s25, %s28
      %p34 = scmp.eq.s32.totalorder %s15, 0
      %p35 = por %p33, %p34
      %p36 = scmp.ne.s32.totalorder %s25, %s28
      %p37 = scmp.eq.s32.totalorder %s20, 1
      %p38 = por %p36, %p37
      %p39 = scmp.ne.s32.totalorder %s28, %s29
      %p40 = scmp.eq.s32.totalorder %s20, 0
      %p41 = por %p39, %p40
      %p42 = scmp.ne.s32.totalorder %s28, %s29
      %p43 = scmp.eq.s32.totalorder %s21, 1
      %p44 = por %p42, %p43
      %p46 = scmp.ne.s32.totalorder %s29, %s45
      %p47 = scmp.eq.s32.totalorder %s21, 0
      %p48 = por %p46, %p47
      %s50 = sadd.s32 %s49, 1
      %p53 = scmp.eq.s32.totalorder %s15, 1
      %p54 = scmp.ne.s32.totalorder %s49, %s51
      %p55 = scmp.eq.s32.totalorder %s15, 0
      %p56 = por %p54, %p55
      %p57 = scmp.ne.s32.totalorder %s49, %s51
      %p58 = scmp.eq.s32.totalorder %s20, 1
      %p59 = por %p57, %p58
      %p60 = scmp.ne.s32.totalorder %s51, %s52
      %p61 = scmp.eq.s32.totalorder %s20, 0
      %p62 = por %p60, %p61
      %p63 = scmp.ne.s32.totalorder %s51, %s52
      %p64 = scmp.eq.s32.totalorder %s21, 1
      %p65 = por %p63, %p64
      %p67 = scmp.ne.s32.totalorder %s52, %s66
      %p68 = scmp.eq.s32.totalorder %s21, 0
      %p69 = por %p67, %p68
      %s70 = ssub.s32 %s15, %s22
      %p71 = scmp.eq.s32.totalorder %s70, 0
      %s73 = sadd.s32 %s72, 1
      %s74 = scalar_select %p71, %s72, %s73
      %p77 = pneg %p71
      %p78 = scmp.eq.s32.totalorder %s15, 1
      %p79 = por %p77, %p78
      %p80 = scmp.ne.s32.totalorder %s72, %s75
      %p81 = scmp.eq.s32.totalorder %s15, 0
      %p82 = por %p80, %p81
      %p83 = scmp.ne.s32.totalorder %s72, %s75
      %p84 = scmp.eq.s32.totalorder %s20, 1
      %p85 = por %p83, %p84
      %p86 = scmp.ne.s32.totalorder %s75, %s76
      %p87 = scmp.eq.s32.totalorder %s20, 0
      %p88 = por %p86, %p87
      %p89 = scmp.ne.s32.totalorder %s75, %s76
      %p90 = scmp.eq.s32.totalorder %s21, 1
      %p91 = por %p89, %p90
      %p93 = scmp.ne.s32.totalorder %s76, %s92
      %p94 = scmp.eq.s32.totalorder %s21, 0
      %p95 = por %p93, %p94
      %p96 = scmp.le.s32.totalorder 1, %s15
      %p97 = scmp.lt.s32.totalorder %s15, 3
      %p98 = pnand %p96, %p97
      %p99 = pneg %p98
      // Predicated region
      $region9: #{tpu_custom_call.1} parent=5 // pred_check
        _
      $region10: #{tpu_custom_call.1} parent=5 // pred_check_branch
        %101 = sbr.rel (%p98) target = $region12
      $region11: #{tpu_custom_call.1} parent=5 // pred_region
        %s102 = ssub.s32 %s15, 1
        // Predicated region
        $region13: #{tpu_custom_call.1} parent=11 // pred_check
          %p103 = pneg %p62
        $region14: #{tpu_custom_call.1} parent=11 // pred_check_branch
          %105 = sbr.rel (%p103) target = $region16
        $region15: #{tpu_custom_call.1} parent=11 // pred_region
          %s107 = ssub.s32 1024, 1024
          %108 = vsyncadd [#allocation6], %s107
          %s109 = sshll.u32 [#allocation5], 4
          %s110 = int_to_ptr.vmem [resolvable:$true] %s109
          %115 = dma.hbm_to_vmem [thread:$0]  %s1, 1024, %s110, [#allocation6], 64, 64, 4
        $region16: #{tpu_custom_call.1} parent=11 // pred_fallthru
          _
      $region12: #{tpu_custom_call.1} parent=5 // pred_fallthru
        _
      %p116 = scmp.lt.s32.totalorder %s15, 2
      // Predicated region
      $region17: #{tpu_custom_call.1} parent=5 // pred_check
        %p117 = pneg %p116
      $region18: #{tpu_custom_call.1} parent=5 // pred_check_branch
        %119 = sbr.rel (%p117) target = $region20
      $region19: #{tpu_custom_call.1} parent=5 // pred_region
        // Predicated region
        $region21: #{tpu_custom_call.1} parent=19 // pred_check
          %p120 = pneg %p35
        $region22: #{tpu_custom_call.1} parent=19 // pred_check_branch
          %122 = sbr.rel (%p120) target = $region24
        $region23: #{tpu_custom_call.1} parent=19 // pred_region
          %s123 = sand.u32 %s25, 1
          %s124 = scalar_lea.sflag [#allocation3], %s123
          %s125 = sand.u32 %s25, 1
          %s126 = smul.addr %s125, 32
          %s127 = scalar_lea.vmem [#allocation2], %s126
          %s128 = smul.u32 8, %s15
          %s130 = ssub.s32 512, 512
          %131 = vsyncadd %s124, %s130
          %s132 = smul.addr %s128, 64
          %s133 = scalar_lea.hbm %s0, %s132
          %s134 = sshll.u32 %s127, 4
          %s135 = int_to_ptr.vmem [resolvable:$true] %s134
          %140 = dma.hbm_to_vmem [thread:$0]  %s133, 512, %s135, %s124, 64, 64, 4
        $region24: #{tpu_custom_call.1} parent=19 // pred_fallthru
          _
      $region20: #{tpu_custom_call.1} parent=5 // pred_fallthru
        _
      %p141 = scmp.le.s32.totalorder 1, %s15
      %p142 = scmp.lt.s32.totalorder %s15, 3
      %p143 = pnand %p141, %p142
      %p144 = pneg %p143
      // Predicated region
      $region25: #{tpu_custom_call.1} parent=5 // pred_check
        _
      $region26: #{tpu_custom_call.1} parent=5 // pred_check_branch
        %146 = sbr.rel (%p143) target = $region28
      $region27: #{tpu_custom_call.1} parent=5 // pred_region
        %s147 = ssub.s32 %s15, 1
        %s148 = sand.u32 %s28, 1
        %s149 = scalar_lea.sflag [#allocation3], %s148
        %s150 = sand.u32 %s28, 1
        %s151 = smul.addr %s150, 32
        %s152 = scalar_lea.vmem [#allocation2], %s151
        // Predicated region
        $region29: #{tpu_custom_call.1} parent=27 // pred_check
          %p153 = pneg %p41
        $region30: #{tpu_custom_call.1} parent=27 // pred_check_branch
          %155 = sbr.rel (%p153) target = $region32
        $region31: #{tpu_custom_call.1} parent=27 // pred_region
          %156 = dma.done %s149, 512
        $region32: #{tpu_custom_call.1} parent=27 // pred_fallthru
          _
        // Predicated region
        $region33: #{tpu_custom_call.1} parent=27 // pred_check
          %p157 = pneg %p62
        $region34: #{tpu_custom_call.1} parent=27 // pred_check_branch
          %159 = sbr.rel (%p157) target = $region36
        $region35: #{tpu_custom_call.1} parent=27 // pred_region
          %160 = dma.done [#allocation6], 1024
        $region36: #{tpu_custom_call.1} parent=27 // pred_fallthru
          _
        %s161 = sand.u32 %s28, 1
        %s162 = scalar_lea.sflag [#allocation3], %s161
        %s163 = sand.u32 %s28, 1
        %s164 = smul.addr %s163, 32
        %s165 = scalar_lea.vmem [#allocation2], %s164
        %p166 = pneg %p41
        %p167 = pneg %p38
        %p168 = pneg %p62
        %p169 = pneg %p59
        %p170 = pneg %p88
        %p171 = pneg %p85
        %s172 = sand.u32 %s75, 1
        %s173 = scalar_lea.sflag [#allocation4], %s172
        %s174 = sand.u32 %s75, 1
        %s175 = smul.addr %s174, 64
        %s176 = scalar_lea.vmem [#allocation7], %s175
        %s177 = smul.u32 8, %s20
        %s178 = smul.u32 8, %s20
        %v180 = vld [vmem:[%s152] sm:$0xf]
        %v181 = vld [vmem:[%s152 + $0x4] sm:$0xf]
        %v182 = vld [vmem:[%s152 + $0x8] sm:$0xf]
        %v183 = vld [vmem:[%s152 + $0xc] sm:$0xf]
        %v184 = vld [vmem:[%s152 + $0x10] sm:$0xf]
        %v185 = vld [vmem:[%s152 + $0x14] sm:$0xf]
        %v186 = vld [vmem:[%s152 + $0x18] sm:$0xf]
        %v187 = vld [vmem:[%s152 + $0x1c] sm:$0xf]
        %v188 = vld [vmem:[#allocation5] sm:$0xf]
        %v189 = vld [vmem:[#allocation5 + $0x4] sm:$0xf]
        %v190 = vld [vmem:[#allocation5 + $0x8] sm:$0xf]
        %v191 = vld [vmem:[#allocation5 + $0xc] sm:$0xf]
        %v192 = vld [vmem:[#allocation5 + $0x10] sm:$0xf]
        %v193 = vld [vmem:[#allocation5 + $0x14] sm:$0xf]
        %v194 = vld [vmem:[#allocation5 + $0x18] sm:$0xf]
        %v195 = vld [vmem:[#allocation5 + $0x1c] sm:$0xf]
        %v196 = vld [vmem:[#allocation5 + $0x20] sm:$0xf]
        %v197 = vld [vmem:[#allocation5 + $0x24] sm:$0xf]
        %v198 = vld [vmem:[#allocation5 + $0x28] sm:$0xf]
        %v199 = vld [vmem:[#allocation5 + $0x2c] sm:$0xf]
        %v200 = vld [vmem:[#allocation5 + $0x30] sm:$0xf]
        %v201 = vld [vmem:[#allocation5 + $0x34] sm:$0xf]
        %v202 = vld [vmem:[#allocation5 + $0x38] sm:$0xf]
        %v203 = vld [vmem:[#allocation5 + $0x3c] sm:$0xf]
        %v212 = vunpack.c.l.b16 %v180
        %v213 = vunpack.c.l.b16 %v181
        %v214 = vunpack.c.l.b16 %v182
        %v215 = vunpack.c.l.b16 %v183
        %v216 = vunpack.c.l.b16 %v184
        %v217 = vunpack.c.l.b16 %v185
        %v218 = vunpack.c.l.b16 %v186
        %v219 = vunpack.c.l.b16 %v187
        %v220 = vpack.c.b16 %v213, %v212
        %v221 = vpack.c.b16 %v215, %v214
        %v222 = vpack.c.b16 %v217, %v216
        %v223 = vpack.c.b16 %v219, %v218
        %v244 = vunpack.c.l.b16 %v188
        %v245 = vunpack.c.l.b16 %v189
        %v246 = vunpack.c.l.b16 %v190
        %v247 = vunpack.c.l.b16 %v191
        %v248 = vunpack.c.l.b16 %v192
        %v249 = vunpack.c.l.b16 %v193
        %v250 = vunpack.c.l.b16 %v194
        %v251 = vunpack.c.l.b16 %v195
        %v252 = vunpack.c.l.b16 %v196
        %v253 = vunpack.c.l.b16 %v197
        %v254 = vunpack.c.l.b16 %v198
        %v255 = vunpack.c.l.b16 %v199
        %v256 = vunpack.c.l.b16 %v200
        %v257 = vunpack.c.l.b16 %v201
        %v258 = vunpack.c.l.b16 %v202
        %v259 = vunpack.c.l.b16 %v203
        %v260 = vpack.c.b16 %v245, %v244
        %v261 = vpack.c.b16 %v247, %v246
        %v262 = vpack.c.b16 %v249, %v248
        %v263 = vpack.c.b16 %v251, %v250
        %v264 = vpack.c.b16 %v253, %v252
        %v265 = vpack.c.b16 %v255, %v254
        %v266 = vpack.c.b16 %v257, %v256
        %v267 = vpack.c.b16 %v259, %v258
        %276 = vmatprep.subr.bf16.mxu0 0
        %277 = vmatpush1.bf16.msra.mxu0 %v267
        %278 = vmatprep.subr.bf16.mxu0 0
        %279 = vmatpush1.bf16.msra.mxu0 %v266
        %280 = vmatprep.subr.bf16.mxu0 0
        %281 = vmatpush1.bf16.msra.mxu0 %v265
        %282 = vmatprep.subr.bf16.mxu0 0
        %283 = vmatpush1.bf16.msra.mxu0 %v264
        %284 = vmatprep.subr.bf16.mxu0 0
        %285 = vmatpush1.bf16.msra.mxu0 %v263
        %286 = vmatprep.subr.bf16.mxu0 0
        %287 = vmatpush1.bf16.msra.mxu0 %v262
        %288 = vmatprep.subr.bf16.mxu0 0
        %289 = vmatpush1.bf16.msra.mxu0 %v261
        %290 = vmatprep.subr.bf16.mxu0 0
        %291 = vmatpush1.bf16.msra.mxu0 %v260
        %292 = vmatprep.subr.bf16.mxu0 0
        %293 = vmatpush2.bf16.msra.mxu0 0
        %294 = vmatprep.subr.bf16.mxu0 0
        %295 = vmatpush2.bf16.msra.mxu0 0
        %296 = vmatprep.subr.bf16.mxu0 0
        %297 = vmatpush2.bf16.msra.mxu0 0
        %298 = vmatprep.subr.bf16.mxu0 0
        %299 = vmatpush2.bf16.msra.mxu0 0
        %300 = vmatprep.subr.bf16.mxu0 0
        %301 = vmatpush2.bf16.msra.mxu0 0
        %302 = vmatprep.subr.bf16.mxu0 0
        %303 = vmatpush2.bf16.msra.mxu0 0
        %304 = vmatprep.subr.bf16.mxu0 0
        %305 = vmatpush2.bf16.msra.mxu0 0
        %306 = vmatprep.subr.bf16.mxu0 0
        %307 = vmatpush2.bf16.msra.mxu0 0
        %308 = vmatprep.mubr.bf16.mxu0 0
        %309 = vmatmul.mubr.bf16.gmra.mxu0 %v220
        %v310 = vpop.f32.mrf.mxu0
        %v311 = vadd.f32 0.0, %v310
        %v312 = vpop.f32.mrf.mxu0
        %v313 = vpop.f32.mrf.mxu0
        %v314 = vadd.f32 0.0, %v313
        %v315 = vpop.f32.mrf.mxu0
        %316 = vmatprep.mubr.bf16.mxu0 0
        %317 = vmatmul.mubr.bf16.gmra.mxu0 %v221
        %v318 = vpop.f32.mrf.mxu0
        %v319 = vadd.f32 0.0, %v318
        %v320 = vpop.f32.mrf.mxu0
        %v321 = vpop.f32.mrf.mxu0
        %v322 = vadd.f32 0.0, %v321
        %v323 = vpop.f32.mrf.mxu0
        %324 = vmatprep.mubr.bf16.mxu0 0
        %325 = vmatmul.mubr.bf16.gmra.mxu0 %v222
        %v326 = vpop.f32.mrf.mxu0
        %v327 = vadd.f32 0.0, %v326
        %v328 = vpop.f32.mrf.mxu0
        %v329 = vpop.f32.mrf.mxu0
        %v330 = vadd.f32 0.0, %v329
        %v331 = vpop.f32.mrf.mxu0
        %332 = vmatprep.mubr.bf16.mxu0 0
        %333 = vmatmul.mubr.bf16.gmra.mxu0 %v223
        %v334 = vpop.f32.mrf.mxu0
        %v335 = vadd.f32 0.0, %v334
        %v336 = vpop.f32.mrf.mxu0
        %v337 = vpop.f32.mrf.mxu0
        %v338 = vadd.f32 0.0, %v337
        %v339 = vpop.f32.mrf.mxu0
        %340 = vdwg.mxu0
        %v341 = vmax.f32 %v311, 0.0
        %v342 = vmax.f32 %v314, 0.0
        %v343 = vmax.f32 %v319, 0.0
        %v344 = vmax.f32 %v322, 0.0
        %v345 = vmax.f32 %v327, 0.0
        %v346 = vmax.f32 %v330, 0.0
        %v347 = vmax.f32 %v335, 0.0
        %v348 = vmax.f32 %v338, 0.0
        %349 = vst [vmem:[%s176] sm:$0xff] %v341
        %350 = vst [vmem:[%s176 + $0x8] sm:$0xff] %v342
        %351 = vst [vmem:[%s176 + $0x10] sm:$0xff] %v343
        %352 = vst [vmem:[%s176 + $0x18] sm:$0xff] %v344
        %353 = vst [vmem:[%s176 + $0x20] sm:$0xff] %v345
        %354 = vst [vmem:[%s176 + $0x28] sm:$0xff] %v346
        %355 = vst [vmem:[%s176 + $0x30] sm:$0xff] %v347
        %356 = vst [vmem:[%s176 + $0x38] sm:$0xff] %v348
        %s357 = sand.u32 %s75, 1
        %s358 = scalar_lea.sflag [#allocation4], %s357
        %s359 = sand.u32 %s75, 1
        %s360 = smul.addr %s359, 64
        %s361 = scalar_lea.vmem [#allocation7], %s360
        // Predicated region
        $region37: #{tpu_custom_call.1} parent=27 // pred_check
          %p362 = pneg %p85
        $region38: #{tpu_custom_call.1} parent=27 // pred_check_branch
          %364 = sbr.rel (%p362) target = $region40
        $region39: #{tpu_custom_call.1} parent=27 // pred_region
          %s365 = smul.u32 8, %s20
          %s367 = ssub.s32 1024, 1024
          %368 = vsyncadd %s358, %s367
          %s369 = smul.addr %s365, 128
          %s370 = scalar_lea.hbm %s2, %s369
          %s371 = sshll.u32 %s361, 4
          %s372 = int_to_ptr.vmem [resolvable:$true] %s371
          %377 = dma.vmem_to_hbm [thread:$0]  %s372, 1024, %s370, %s358, 128, 128, 8
        $region40: #{tpu_custom_call.1} parent=27 // pred_fallthru
          _
      $region28: #{tpu_custom_call.1} parent=5 // pred_fallthru
        _
      %p378 = scmp.le.s32.totalorder 2, %s15
      // Predicated region
      $region41: #{tpu_custom_call.1} parent=5 // pred_check
        %p379 = pneg %p378
      $region42: #{tpu_custom_call.1} parent=5 // pred_check_branch
        %381 = sbr.rel (%p379) target = $region44
      $region43: #{tpu_custom_call.1} parent=5 // pred_region
        %s382 = ssub.s32 %s15, 2
        // Predicated region
        $region45: #{tpu_custom_call.1} parent=43 // pred_check
          %p383 = pneg %p91
        $region46: #{tpu_custom_call.1} parent=43 // pred_check_branch
          %385 = sbr.rel (%p383) target = $region48
        $region47: #{tpu_custom_call.1} parent=43 // pred_region
          %s386 = sand.u32 %s76, 1
          %s387 = scalar_lea.sflag [#allocation4], %s386
          %s388 = sand.u32 %s76, 1
          %s389 = smul.addr %s388, 64
          %s390 = scalar_lea.vmem [#allocation7], %s389
          %391 = dma.done %s387, 1024
        $region48: #{tpu_custom_call.1} parent=43 // pred_fallthru
          _
      $region44: #{tpu_custom_call.1} parent=5 // pred_fallthru
        _
    $region6: #{tpu_custom_call.1} parent=1 // loop_footer
      %s19 = sadd.s32 1, %s15
    $region7: #{tpu_custom_call.1} parent=1 // loop_footer_branch
      %14 = sbr.rel target = $region3
    $region8: #{tpu_custom_call.1} parent=1 // loop_exit
      _
    %392 = vsyncpa [#allocation3], 1
    %s393 = scalar_lea.sflag [#allocation3], 1
    %394 = vsyncpa %s393, 1
    %395 = vsyncpa [#allocation6], 1
    %396 = vsyncpa [#allocation4], 1
    %s397 = scalar_lea.sflag [#allocation4], 1
    %398 = vsyncpa %s397, 1

</llo_original>
